<compile_context>
chip_gen: v7x
topology: tpu7x:2x2x1
jax: 0.10.0
libtpu: 0.0.40
codegen_flags: <defaults>
</compile_context>

<pallas_src>
import functools
import math

import jax
import jax.numpy as jnp
from jax.experimental import pallas as pl
from jax.experimental.pallas import tpu as pltpu


def _round_up(x, m):
    return ((x + m - 1) // m) * m


def _dpw_kernel(x_ref, w_ref, b_ref, o_ref, *, k, l_tile):
    # x_ref: (C_in_p, L_in_p)     padded input for this batch element (resident over t)
    # w_ref: (k, C_out_p, C_in_p) folded depthwise*pointwise weights
    # b_ref: (C_out_p, 1)         folded bias (f32)
    # o_ref: (C_out_p, l_tile)    output tile
    t = pl.program_id(1)
    base = pl.multiple_of(t * l_tile, 128)

    # Start the f32 accumulator at the (lane-broadcast) bias.
    acc = jnp.broadcast_to(b_ref[...], o_ref.shape).astype(jnp.float32)
    for j in range(k):                       # k is small & static -> unrolled MXU matmuls
        x_j = x_ref[:, pl.ds(base + j, l_tile)]          # (C_in_p, l_tile), native dtype
        acc = acc + jnp.dot(w_ref[j], x_j, preferred_element_type=jnp.float32)

    o_ref[...] = acc.astype(o_ref.dtype)


def depth_pointwise_conv1d(x, wd, bd, wp, bp, *, k, l_tile_max=512):
    """x: (B, C_in, L); returns (B, C_out, L_out). Matches the PyTorch module forward."""
    B, C_in, L = x.shape
    C_out = wp.shape[0]
    pad = k // 2
    l_out = L + 2 * pad - (k - 1)            # = L for odd k, L + 1 for even k

    # sublane-aligned channel padding, lane-aligned length padding
    c_in_p = _round_up(C_in, 8)
    c_out_p = _round_up(C_out, 8)
    l_tile = min(_round_up(l_tile_max, 128), _round_up(l_out, 128))
    l_out_p = _round_up(l_out, l_tile)
    n_lt = l_out_p // l_tile
    l_in_p = l_out_p + (k - 1)               # includes conv halo

    # single pad pass: channel pad + left halo + right (halo + lane-align) pad
    xp = jnp.pad(x, ((0, 0), (0, c_in_p - C_in), (pad, l_in_p - L - pad)))

    # fold depthwise into pointwise (zero-padded rows/cols contribute exactly 0)
    wp_p = jnp.pad(wp, ((0, c_out_p - C_out), (0, c_in_p - C_in)))
    bp_p = jnp.pad(bp, (0, c_out_p - C_out))
    if k == 1:
        # depth_conv is nn.Identity(): pointwise only
        wcomb = wp_p[None, :, :]                                    # (1, C_out_p, C_in_p)
        bias = bp_p
    else:
        wd_p = jnp.pad(wd, ((0, c_in_p - C_in), (0, 0)))            # (C_in_p, k)
        bd_p = jnp.pad(bd, (0, c_in_p - C_in))
        # wcomb[j, o, c] = wp[o, c] * wd[c, j]
        wcomb = wp_p[None, :, :] * jnp.transpose(wd_p)[:, None, :]  # (k, C_out_p, C_in_p)
        bias = bp_p + wp_p @ bd_p
    wcomb = wcomb.astype(x.dtype)                 # keep MXU operands in input dtype
    bias2 = bias.reshape(c_out_p, 1).astype(jnp.float32)

    kernel = functools.partial(_dpw_kernel, k=k, l_tile=l_tile)

    out_p = pl.pallas_call(
        kernel,
        out_shape=jax.ShapeDtypeStruct((B, c_out_p, l_out_p), x.dtype),
        grid_spec=pltpu.PrefetchScalarGridSpec(
            num_scalar_prefetch=0,
            grid=(B, n_lt),
            in_specs=[
                # resident per-batch input (block index constant along t -> DMA'd once per b)
                pl.BlockSpec((None, c_in_p, l_in_p), lambda b, t: (b, 0, 0)),
                pl.BlockSpec((k, c_out_p, c_in_p), lambda b, t: (0, 0, 0)),
                pl.BlockSpec((c_out_p, 1), lambda b, t: (0, 0)),
            ],
            out_specs=pl.BlockSpec((None, c_out_p, l_tile), lambda b, t: (b, 0, t)),
        ),
        compiler_params=pltpu.CompilerParams(
            dimension_semantics=("parallel", "parallel"),
            vmem_limit_bytes=32 * 1024 * 1024,
        ),
    )(xp, wcomb, bias2)

    return out_p[:, :C_out, :l_out]


def init_params(key, in_ch, out_ch, k, dtype=jnp.float32):
    """Deterministic init mirroring PyTorch Conv1d defaults (uniform +- 1/sqrt(fan_in))."""
    kd_w, kd_b, kp_w, kp_b = jax.random.split(key, 4)
    bound_d = 1.0 / math.sqrt(max(k, 1))
    wd = jax.random.uniform(kd_w, (in_ch, k), dtype, -bound_d, bound_d)
    bd = jax.random.uniform(kd_b, (in_ch,), dtype, -bound_d, bound_d)
    bound_p = 1.0 / math.sqrt(in_ch)
    wp = jax.random.uniform(kp_w, (out_ch, in_ch), dtype, -bound_p, bound_p)
    bp = jax.random.uniform(kp_b, (out_ch,), dtype, -bound_p, bound_p)
    return wd, bd, wp, bp


def _reference(x, wd, bd, wp, bp, k):
    """Pure-JAX reference of the PyTorch forward for the correctness check."""
    B, C_in, L = x.shape
    if k == 1:
        y = x
    else:
        pad = k // 2
        xp = jnp.pad(x, ((0, 0), (0, 0), (pad, pad)))
        l_out = L + 2 * pad - (k - 1)
        y = sum(wd[None, :, j:j + 1] * xp[:, :, j:j + l_out] for j in range(k))
        y = y + bd[None, :, None]
    return jnp.einsum("oc,bcl->bol", wp, y) + bp[None, :, None]


if __name__ == "__main__":
    B, C_in, C_out, L = 2, 4, 8, 16

    key = jax.random.PRNGKey(0)
    k_x, k_p = jax.random.split(key)
    x = jax.random.normal(k_x, (B, C_in, L), dtype=jnp.float32)

    for K in (1, 2, 3):   # identity path, even-k path, odd-k path
        wd, bd, wp, bp = init_params(k_p, C_in, C_out, K)
        out = depth_pointwise_conv1d(x, wd, bd, wp, bp, k=K)
        out = jax.block_until_ready(out)
        ref = _reference(x, wd, bd, wp, bp, K)
        assert out.shape == ref.shape, (K, out.shape, ref.shape)
        assert jnp.allclose(out, ref, atol=1e-4, rtol=1e-4), f"mismatch vs reference (k={K})"

    print("KERNEL_OK")
</pallas_src>

<mosaic_0001>
module attributes {stable_mosaic.version = 11 : i64} {
  func.func @_dpw_kernel(%arg0: i32, %arg1: i32, %arg2: memref<1x8x128xf32, #tpu.memory_space<vmem>>, %arg3: memref<1x8x8xf32, #tpu.memory_space<vmem>>, %arg4: memref<8x1xf32, #tpu.memory_space<vmem>>, %arg5: memref<1x8x128xf32, #tpu.memory_space<vmem>>) attributes {dimension_semantics = [#tpu.dimension_semantics<parallel>, #tpu.dimension_semantics<parallel>], iteration_bounds = array<i64: 2, 1>, scalar_prefetch = 0 : i64, scratch_operands = 0 : i64, tpu.core_type = #tpu.core_type<tc>, window_params = [{transform_indices = @transform_0, window_bounds = array<i64: 1, 8, 128>}, {pipeline_mode = #tpu.pipeline_mode<synchronous>, transform_indices = @transform_1, window_bounds = array<i64: 1, 8, 8>}, {pipeline_mode = #tpu.pipeline_mode<synchronous>, transform_indices = @transform_2, window_bounds = array<i64: 8, 1>}, {transform_indices = @transform_3, window_bounds = array<i64: 1, 8, 128>}]} {
    %c128_i32 = arith.constant 128 : i32
    %0 = arith.muli %arg1, %c128_i32 : i32
    %1 = tpu.assume_multiple %0, 128 : i32
    %c0 = arith.constant 0 : index
    %c0_0 = arith.constant 0 : index
    %2 = vector.load %arg4[%c0, %c0_0] : memref<8x1xf32, #tpu.memory_space<vmem>>, vector<8x1xf32>
    %3 = vector.shape_cast %2 : vector<8x1xf32> to vector<8x1xf32>
    %4 = vector.broadcast %3 : vector<8x1xf32> to vector<8x128xf32>
    %c0_i32 = arith.constant 0 : i32
    %5 = arith.addi %1, %c0_i32 : i32
    %c0_1 = arith.constant 0 : index
    %c0_2 = arith.constant 0 : index
    %6 = arith.index_cast %5 : i32 to index
    %7 = vector.load %arg2[%c0_1, %c0_2, %6] : memref<1x8x128xf32, #tpu.memory_space<vmem>>, vector<1x8x128xf32>
    %8 = vector.shape_cast %7 : vector<1x8x128xf32> to vector<8x128xf32>
    %c0_3 = arith.constant 0 : index
    %c0_4 = arith.constant 0 : index
    %c0_5 = arith.constant 0 : index
    %9 = vector.load %arg3[%c0_3, %c0_4, %c0_5] : memref<1x8x8xf32, #tpu.memory_space<vmem>>, vector<1x8x8xf32>
    %10 = vector.shape_cast %9 : vector<1x8x8xf32> to vector<8x8xf32>
    %cst = arith.constant dense<0.000000e+00> : vector<8x128xf32>
    %11 = tpu.matmul %10, %8, %cst {dimension_numbers = #tpu.dot_dimension_numbers<[1], [0], [0], [1], [0, 0, 1, 1], [], []>} : vector<8x8xf32>, vector<8x128xf32>, vector<8x128xf32> -> vector<8x128xf32>
    %12 = arith.addf %4, %11 : vector<8x128xf32>
    %c0_6 = arith.constant 0 : index
    %c0_7 = arith.constant 0 : index
    %c0_8 = arith.constant 0 : index
    %13 = vector.load %arg5[%c0_6, %c0_7, %c0_8] : memref<1x8x128xf32, #tpu.memory_space<vmem>>, vector<1x8x128xf32>
    %14 = vector.shape_cast %13 : vector<1x8x128xf32> to vector<8x128xf32>
    %15 = vector.shape_cast %12 : vector<8x128xf32> to vector<1x8x128xf32>
    tpu.vector_store %arg5[%c0_6, %c0_7, %c0_8], %15 {strides = array<i32>} : memref<1x8x128xf32, #tpu.memory_space<vmem>>, vector<1x8x128xf32>,
    return
  }
  func.func @transform_0(%arg0: i32, %arg1: i32) -> (i32, i32, i32) {
    %c0_i32 = arith.constant 0 : i32
    %c0_i32_0 = arith.constant 0 : i32
    %c0_i32_1 = arith.constant 0 : i32
    return %arg0, %c0_i32, %c0_i32_0 : i32, i32, i32
  }
  func.func @transform_1(%arg0: i32, %arg1: i32) -> (i32, i32, i32) {
    %c0_i32 = arith.constant 0 : i32
    %c0_i32_0 = arith.constant 0 : i32
    %c0_i32_1 = arith.constant 0 : i32
    %c0_i32_2 = arith.constant 0 : i32
    return %c0_i32, %c0_i32_0, %c0_i32_1 : i32, i32, i32
  }
  func.func @transform_2(%arg0: i32, %arg1: i32) -> (i32, i32) {
    %c0_i32 = arith.constant 0 : i32
    %c0_i32_0 = arith.constant 0 : i32
    %c0_i32_1 = arith.constant 0 : i32
    return %c0_i32, %c0_i32_0 : i32, i32
  }
  func.func @transform_3(%arg0: i32, %arg1: i32) -> (i32, i32, i32) {
    %c0_i32 = arith.constant 0 : i32
    %c0_i32_0 = arith.constant 0 : i32
    return %arg0, %c0_i32, %arg1 : i32, i32, i32
  }
}

</mosaic_0001>

<llo_original>
// kernel: tpu_custom_call.1
$region0: #{tpu_custom_call.1}
  #allocation0 [shape = 'u32[]', space=smem, size = 0x4, offset = 0x4, fixed_abs, tag = 'smem constant byte address 0x4 - core index']
  #allocation1 [shape = 'u32[144,128]{1,0:T(1,128)}', space=vmem, size = 0x12000, scoped, tag = 'internal scratch']
  %s0 = inlined_call_operand.hbm [shape: f32[2,8,128], index: 0, kind: input, shape index: {}]
  %s1 = inlined_call_operand.vmem [shape: f32[1,8,8], index: 1, kind: input, shape index: {}]
  %s2 = inlined_call_operand.vmem [shape: f32[8,1], index: 2, kind: input, shape index: {}]
  %s3 = inlined_call_operand.hbm [shape: f32[2,8,128], index: 3, kind: output, shape index: {}]
  %s4 = sld [smem:[#allocation0]]
  $region49: #{tpu_custom_call.1} parent=0
    _
  %s6 = ssub.s32 1, %s4
  %s7 = scalar_select 0, %s6, %s4
  $region1: #{tpu_custom_call.1} parent=0
    #allocation2 [shape = 'u8[8192]{0}', space=vmem, size = 0x2000, scoped, tag = 'input window, operand 0']
    #allocation3 [shape = 's32[2]{0}', space=sflag, size = 0x8, scoped, tag = 'scoped memory for tpu_custom_call.1']
    #allocation4 [shape = 's32[2]{0}', space=sflag, size = 0x8, scoped, tag = 'scoped memory for tpu_custom_call.1']
    #allocation5 [shape = 'u8[8192]{0}', space=vmem, size = 0x2000, scoped, tag = 'output window, operand 0']
    %8 = vsyncpa [#allocation3], 0
    %s9 = scalar_lea.sflag [#allocation3], 1
    %10 = vsyncpa %s9, 0
    %11 = vsyncpa [#allocation4], 0
    %s12 = scalar_lea.sflag [#allocation4], 1
    %13 = vsyncpa %s12, 0
    loop: start=0, step=1, limit=4
    $region2: #{tpu_custom_call.1} parent=1 // loop_pre_header
      _
    $region3: #{tpu_custom_call.1} parent=1 // loop_header
      %s15 = sphi 0, %s19
      %p16 = scmp.ge.s32.totalorder %s15, 4
      %s22 = sphi 0, %s34
      %s23 = sphi 0, %s30
      %s24 = sphi 0, %s22
      %s25 = sphi 0, %s23
      %s26 = sphi 0, %s24
      %s27 = sphi 0, %s25
      %s37 = sphi 0, %s39
      %s40 = sphi 0, %s37
      %s41 = sphi 0, %s40
      %s57 = sphi 0, %s41
      %s61 = sphi 0, %s61
      %s63 = sphi 0, %s61
      %s64 = sphi 0, %s63
      %s78 = sphi 0, %s64
      %s82 = sphi 0, %s82
      %s84 = sphi 0, %s82
      %s85 = sphi 0, %s84
      %s99 = sphi 0, %s85
      %s107 = sphi 0, %s109
      %s110 = sphi 0, %s107
      %s111 = sphi 0, %s110
      %s127 = sphi 0, %s111
    $region4: #{tpu_custom_call.1} parent=1 // loop_header_branch
      %18 = sbr.rel (%p16) target = $region8
    $region5: #{tpu_custom_call.1} parent=1 // loop_body
      %s20 = ssub.s32 %s15, 1
      %s21 = ssub.s32 %s15, 2
      %s28 = sadd.s32 1, %s23
      %p29 = scmp.ge.s32.totalorder %s28, 1
      %s30 = scalar_select %p29, 0, %s28
      %s31 = sadd.s32 1, %s22
      %s32 = scalar_select %p29, %s31, %s22
      %p33 = scmp.ge.s32.totalorder %s32, 2
      %s34 = scalar_select %p33, 0, %s32
      %s35 = ssub.s32 %s22, %s34
      %p36 = scmp.eq.s32.totalorder %s35, 0
      %s38 = sadd.s32 %s37, 1
      %s39 = scalar_select %p36, %s37, %s38
      %p42 = pneg %p36
      %p43 = scmp.eq.s32.totalorder %s15, 1
      %p44 = por %p42, %p43
      %p45 = scmp.ne.s32.totalorder %s37, %s40
      %p46 = scmp.eq.s32.totalorder %s15, 0
      %p47 = por %p45, %p46
      %p48 = scmp.ne.s32.totalorder %s37, %s40
      %p49 = scmp.eq.s32.totalorder %s20, 1
      %p50 = por %p48, %p49
      %p51 = scmp.ne.s32.totalorder %s40, %s41
      %p52 = scmp.eq.s32.totalorder %s20, 0
      %p53 = por %p51, %p52
      %p54 = scmp.ne.s32.totalorder %s40, %s41
      %p55 = scmp.eq.s32.totalorder %s21, 1
      %p56 = por %p54, %p55
      %p58 = scmp.ne.s32.totalorder %s41, %s57
      %p59 = scmp.eq.s32.totalorder %s21, 0
      %p60 = por %p58, %p59
      %s62 = sadd.s32 %s61, 1
      %p65 = scmp.eq.s32.totalorder %s15, 1
      %p66 = scmp.ne.s32.totalorder %s61, %s63
      %p67 = scmp.eq.s32.totalorder %s15, 0
      %p68 = por %p66, %p67
      %p69 = scmp.ne.s32.totalorder %s61, %s63
      %p70 = scmp.eq.s32.totalorder %s20, 1
      %p71 = por %p69, %p70
      %p72 = scmp.ne.s32.totalorder %s63, %s64
      %p73 = scmp.eq.s32.totalorder %s20, 0
      %p74 = por %p72, %p73
      %p75 = scmp.ne.s32.totalorder %s63, %s64
      %p76 = scmp.eq.s32.totalorder %s21, 1
      %p77 = por %p75, %p76
      %p79 = scmp.ne.s32.totalorder %s64, %s78
      %p80 = scmp.eq.s32.totalorder %s21, 0
      %p81 = por %p79, %p80
      %s83 = sadd.s32 %s82, 1
      %p86 = scmp.eq.s32.totalorder %s15, 1
      %p87 = scmp.ne.s32.totalorder %s82, %s84
      %p88 = scmp.eq.s32.totalorder %s15, 0
      %p89 = por %p87, %p88
      %p90 = scmp.ne.s32.totalorder %s82, %s84
      %p91 = scmp.eq.s32.totalorder %s20, 1
      %p92 = por %p90, %p91
      %p93 = scmp.ne.s32.totalorder %s84, %s85
      %p94 = scmp.eq.s32.totalorder %s20, 0
      %p95 = por %p93, %p94
      %p96 = scmp.ne.s32.totalorder %s84, %s85
      %p97 = scmp.eq.s32.totalorder %s21, 1
      %p98 = por %p96, %p97
      %p100 = scmp.ne.s32.totalorder %s85, %s99
      %p101 = scmp.eq.s32.totalorder %s21, 0
      %p102 = por %p100, %p101
      %s103 = ssub.s32 %s22, %s34
      %s104 = ssub.s32 %s23, %s30
      %s105 = sor.u32 %s103, %s104
      %p106 = scmp.eq.s32.totalorder %s105, 0
      %s108 = sadd.s32 %s107, 1
      %s109 = scalar_select %p106, %s107, %s108
      %p112 = pneg %p106
      %p113 = scmp.eq.s32.totalorder %s15, 1
      %p114 = por %p112, %p113
      %p115 = scmp.ne.s32.totalorder %s107, %s110
      %p116 = scmp.eq.s32.totalorder %s15, 0
      %p117 = por %p115, %p116
      %p118 = scmp.ne.s32.totalorder %s107, %s110
      %p119 = scmp.eq.s32.totalorder %s20, 1
      %p120 = por %p118, %p119
      %p121 = scmp.ne.s32.totalorder %s110, %s111
      %p122 = scmp.eq.s32.totalorder %s20, 0
      %p123 = por %p121, %p122
      %p124 = scmp.ne.s32.totalorder %s110, %s111
      %p125 = scmp.eq.s32.totalorder %s21, 1
      %p126 = por %p124, %p125
      %p128 = scmp.ne.s32.totalorder %s111, %s127
      %p129 = scmp.eq.s32.totalorder %s21, 0
      %p130 = por %p128, %p129
      %p131 = scmp.le.s32.totalorder 1, %s15
      %p132 = scmp.lt.s32.totalorder %s15, 3
      %p133 = pnand %p131, %p132
      %p134 = pneg %p133
      // Predicated region
      $region9: #{tpu_custom_call.1} parent=5 // pred_check
        _
      $region10: #{tpu_custom_call.1} parent=5 // pred_check_branch
        %136 = sbr.rel (%p133) target = $region12
      $region11: #{tpu_custom_call.1} parent=5 // pred_region
        %s137 = ssub.s32 %s15, 1
        // Predicated region
        $region13: #{tpu_custom_call.1} parent=11 // pred_check
          %p138 = pneg %p74
        $region14: #{tpu_custom_call.1} parent=11 // pred_check_branch
          %140 = sbr.rel (%p138) target = $region16
        $region15: #{tpu_custom_call.1} parent=11 // pred_region
          _
        $region16: #{tpu_custom_call.1} parent=11 // pred_fallthru
          _
        // Predicated region
        $region17: #{tpu_custom_call.1} parent=11 // pred_check
          %p141 = pneg %p95
        $region18: #{tpu_custom_call.1} parent=11 // pred_check_branch
          %143 = sbr.rel (%p141) target = $region20
        $region19: #{tpu_custom_call.1} parent=11 // pred_region
          _
        $region20: #{tpu_custom_call.1} parent=11 // pred_fallthru
          _
      $region12: #{tpu_custom_call.1} parent=5 // pred_fallthru
        _
      %p144 = scmp.lt.s32.totalorder %s15, 2
      // Predicated region
      $region21: #{tpu_custom_call.1} parent=5 // pred_check
        %p145 = pneg %p144
      $region22: #{tpu_custom_call.1} parent=5 // pred_check_branch
        %147 = sbr.rel (%p145) target = $region24
      $region23: #{tpu_custom_call.1} parent=5 // pred_region
        // Predicated region
        $region25: #{tpu_custom_call.1} parent=23 // pred_check
          %p148 = pneg %p47
        $region26: #{tpu_custom_call.1} parent=23 // pred_check_branch
          %150 = sbr.rel (%p148) target = $region28
        $region27: #{tpu_custom_call.1} parent=23 // pred_region
          %s151 = sand.u32 %s37, 1
          %s152 = scalar_lea.sflag [#allocation3], %s151
          %s153 = sand.u32 %s37, 1
          %s154 = smul.addr %s153, 8
          %s155 = scalar_lea.vmem [#allocation2], %s154
          %s157 = ssub.s32 128, 128
          %158 = vsyncadd %s152, %s157
          %s159 = smul.addr %s22, 128
          %s160 = scalar_lea.hbm %s0, %s159
          %s162 = sshll.u32 %s155, 4
          %s163 = int_to_ptr.vmem [resolvable:$true] %s162
          %165 = dma.hbm_to_vmem [thread:$0]  %s160, 128, %s163, %s152
        $region28: #{tpu_custom_call.1} parent=23 // pred_fallthru
          _
      $region24: #{tpu_custom_call.1} parent=5 // pred_fallthru
        _
      %p166 = scmp.le.s32.totalorder 1, %s15
      %p167 = scmp.lt.s32.totalorder %s15, 3
      %p168 = pnand %p166, %p167
      %p169 = pneg %p168
      // Predicated region
      $region29: #{tpu_custom_call.1} parent=5 // pred_check
        _
      $region30: #{tpu_custom_call.1} parent=5 // pred_check_branch
        %171 = sbr.rel (%p168) target = $region32
      $region31: #{tpu_custom_call.1} parent=5 // pred_region
        %s172 = ssub.s32 %s15, 1
        %s173 = sand.u32 %s40, 1
        %s174 = scalar_lea.sflag [#allocation3], %s173
        %s175 = sand.u32 %s40, 1
        %s176 = smul.addr %s175, 8
        %s177 = scalar_lea.vmem [#allocation2], %s176
        // Predicated region
        $region33: #{tpu_custom_call.1} parent=31 // pred_check
          %p178 = pneg %p53
        $region34: #{tpu_custom_call.1} parent=31 // pred_check_branch
          %180 = sbr.rel (%p178) target = $region36
        $region35: #{tpu_custom_call.1} parent=31 // pred_region
          %181 = dma.done %s174, 128
        $region36: #{tpu_custom_call.1} parent=31 // pred_fallthru
          _
        %s182 = sand.u32 %s40, 1
        %s183 = scalar_lea.sflag [#allocation3], %s182
        %s184 = sand.u32 %s40, 1
        %s185 = smul.addr %s184, 8
        %s186 = scalar_lea.vmem [#allocation2], %s185
        %p187 = pneg %p53
        %p188 = pneg %p50
        %p189 = pneg %p74
        %p190 = pneg %p71
        %p191 = pneg %p95
        %p192 = pneg %p92
        %p193 = pneg %p123
        %p194 = pneg %p120
        %s195 = sand.u32 %s110, 1
        %s196 = scalar_lea.sflag [#allocation4], %s195
        %s197 = sand.u32 %s110, 1
        %s198 = smul.addr %s197, 8
        %s199 = scalar_lea.vmem [#allocation5], %s198
        %s200 = smul.u32 %s25, 128
        %v201 = vld [vmem:[%s2] sm:$0xff]
        %203 = vset.pattern.permute.xlu0 0
        %204 = vperm.xlu0 %203, %v201
        %v205 = vpop.permute.xlu0 %204
        %s207 = sshra.s32 %s200, 7
        %s208 = sand.u32 %s200, 127
        %s209 = scalar_lea.vmem %s177, %s207 [#allocation2]
        %v210 = vld [vmem:[%s209] sm:$0xff]
        %v211 = vld [vmem:[%s1] sm:$0xff]
        %vm212 = vcmask 64512
        %v214 = vsel %vm212, %v211, 0
        %216 = vmatprep.subr.mxu0 0.0
        %217 = vmatpush1.msra.mxu0 %v210
        %218 = vmatprep.subr.mxu0 0.0
        %219 = vmatpush1.msra.mxu0 0.0
        %220 = vmatprep.subr.mxu0 0.0
        %221 = vmatpush1.msra.mxu0 0.0
        %222 = vmatprep.subr.mxu0 0.0
        %223 = vmatpush1.msra.mxu0 0.0
        %224 = vmatprep.subr.mxu0 0.0
        %225 = vmatpush1.msra.mxu0 0.0
        %226 = vmatprep.subr.mxu0 0.0
        %227 = vmatpush1.msra.mxu0 0.0
        %228 = vmatprep.subr.mxu0 0.0
        %229 = vmatpush1.msra.mxu0 0.0
        %230 = vmatprep.subr.mxu0 0.0
        %231 = vmatpush1.msra.mxu0 0.0
        %232 = vmatprep.subr.mxu0 0.0
        %233 = vmatpush1.msra.mxu0 0.0
        %234 = vmatprep.subr.mxu0 0.0
        %235 = vmatpush1.msra.mxu0 0.0
        %236 = vmatprep.subr.mxu0 0.0
        %237 = vmatpush1.msra.mxu0 0.0
        %238 = vmatprep.subr.mxu0 0.0
        %239 = vmatpush1.msra.mxu0 0.0
        %240 = vmatprep.subr.mxu0 0.0
        %241 = vmatpush1.msra.mxu0 0.0
        %242 = vmatprep.subr.mxu0 0.0
        %243 = vmatpush1.msra.mxu0 0.0
        %244 = vmatprep.subr.mxu0 0.0
        %245 = vmatpush1.msra.mxu0 0.0
        %246 = vmatprep.subr.mxu0 0.0
        %247 = vmatpush1.msra.mxu0 0.0
        %248 = vmatprep.subr.mxu0 0.0
        %249 = vmatpush1.msra.mxu0 0.0
        %250 = vmatprep.subr.mxu0 0.0
        %251 = vmatpush1.msra.mxu0 0.0
        %252 = vmatprep.subr.mxu0 0.0
        %253 = vmatpush1.msra.mxu0 0.0
        %254 = vmatprep.subr.mxu0 0.0
        %255 = vmatpush1.msra.mxu0 0.0
        %256 = vmatprep.subr.mxu0 0.0
        %257 = vmatpush1.msra.mxu0 0.0
        %258 = vmatprep.subr.mxu0 0.0
        %259 = vmatpush1.msra.mxu0 0.0
        %260 = vmatprep.subr.mxu0 0.0
        %261 = vmatpush1.msra.mxu0 0.0
        %262 = vmatprep.subr.mxu0 0.0
        %263 = vmatpush1.msra.mxu0 0.0
        %264 = vmatprep.subr.mxu0 0.0
        %265 = vmatpush1.msra.mxu0 0.0
        %266 = vmatprep.subr.mxu0 0.0
        %267 = vmatpush1.msra.mxu0 0.0
        %268 = vmatprep.subr.mxu0 0.0
        %269 = vmatpush1.msra.mxu0 0.0
        %270 = vmatprep.subr.mxu0 0.0
        %271 = vmatpush1.msra.mxu0 0.0
        %272 = vmatprep.subr.mxu0 0.0
        %273 = vmatpush1.msra.mxu0 0.0
        %274 = vmatprep.subr.mxu0 0.0
        %275 = vmatpush1.msra.mxu0 0.0
        %276 = vmatprep.subr.mxu0 0.0
        %277 = vmatpush1.msra.mxu0 0.0
        %278 = vmatprep.subr.mxu0 0.0
        %279 = vmatpush1.msra.mxu0 0.0
        %280 = vmatprep.mubr.f32.mxu0 0.0
        %281 = vmatmul.mubr.f32.gmra.mrb[0].mxu0 %v214
        %v282 = vpop.f32.mrb[0].mxu0
        %v283 = vadd.f32 0.0, %v282
        %v284 = vpop.f32.mrb[0].mxu0
        %285 = vdwg.mxu0
        %v286 = vadd.f32 %v205, %v283
        %287 = vst [vmem:[%s199] sm:$0xff] %v286
        %s288 = sand.u32 %s110, 1
        %s289 = scalar_lea.sflag [#allocation4], %s288
        %s290 = sand.u32 %s110, 1
        %s291 = smul.addr %s290, 8
        %s292 = scalar_lea.vmem [#allocation5], %s291
        // Predicated region
        $region37: #{tpu_custom_call.1} parent=31 // pred_check
          %p293 = pneg %p120
        $region38: #{tpu_custom_call.1} parent=31 // pred_check_branch
          %295 = sbr.rel (%p293) target = $region40
        $region39: #{tpu_custom_call.1} parent=31 // pred_region
          %s297 = ssub.s32 128, 128
          %298 = vsyncadd %s289, %s297
          %s299 = sadd.s32 %s25, %s24
          %s300 = smul.addr %s299, 128
          %s301 = scalar_lea.hbm %s3, %s300
          %s303 = sshll.u32 %s292, 4
          %s304 = int_to_ptr.vmem [resolvable:$true] %s303
          %306 = dma.vmem_to_hbm [thread:$0]  %s304, 128, %s301, %s289
        $region40: #{tpu_custom_call.1} parent=31 // pred_fallthru
          _
      $region32: #{tpu_custom_call.1} parent=5 // pred_fallthru
        _
      %p307 = scmp.le.s32.totalorder 2, %s15
      // Predicated region
      $region41: #{tpu_custom_call.1} parent=5 // pred_check
        %p308 = pneg %p307
      $region42: #{tpu_custom_call.1} parent=5 // pred_check_branch
        %310 = sbr.rel (%p308) target = $region44
      $region43: #{tpu_custom_call.1} parent=5 // pred_region
        %s311 = ssub.s32 %s15, 2
        // Predicated region
        $region45: #{tpu_custom_call.1} parent=43 // pred_check
          %p312 = pneg %p126
        $region46: #{tpu_custom_call.1} parent=43 // pred_check_branch
          %314 = sbr.rel (%p312) target = $region48
        $region47: #{tpu_custom_call.1} parent=43 // pred_region
          %s315 = sand.u32 %s111, 1
          %s316 = scalar_lea.sflag [#allocation4], %s315
          %s317 = sand.u32 %s111, 1
          %s318 = smul.addr %s317, 8
          %s319 = scalar_lea.vmem [#allocation5], %s318
          %320 = dma.done %s316, 128
        $region48: #{tpu_custom_call.1} parent=43 // pred_fallthru
          _
      $region44: #{tpu_custom_call.1} parent=5 // pred_fallthru
        _
    $region6: #{tpu_custom_call.1} parent=1 // loop_footer
      %s19 = sadd.s32 1, %s15
    $region7: #{tpu_custom_call.1} parent=1 // loop_footer_branch
      %14 = sbr.rel target = $region3
    $region8: #{tpu_custom_call.1} parent=1 // loop_exit
      _
    %321 = vsyncpa [#allocation3], 1
    %s322 = scalar_lea.sflag [#allocation3], 1
    %323 = vsyncpa %s322, 1
    %324 = vsyncpa [#allocation4], 1
    %s325 = scalar_lea.sflag [#allocation4], 1
    %326 = vsyncpa %s325, 1

</llo_original>
